<compile_context>
chip_gen: v6e
topology: v6e:2x2x1
jax: 0.10.0
libtpu: 0.0.40
codegen_flags: <defaults>
</compile_context>

<pallas_src>
import functools

import jax
import jax.numpy as jnp
import numpy as np
from jax.experimental import pallas as pl
from jax.experimental.pallas import tpu as pltpu


# ----------------------------------------------------------------------------
# Shared in-kernel compute: fused K-expert mix
#   acc[o, p] = sum_k g[k, p] * (W_k^T x[:, p] + bias_k)[o]     (f32 accumulation)
# ----------------------------------------------------------------------------
def _mix_experts(x, g, w_ref, bt_ref):
    K = g.shape[0]
    # g-weighted bias:  bias^T (out_dim, K) @ g (K, hw_blk)
    acc = jnp.dot(bt_ref[...], g, preferred_element_type=jnp.float32)
    # K unrolled small dots; the g multiply lives on the narrow in_dim side.
    for k in range(K):
        acc = acc + jnp.dot(w_ref[k], g[k : k + 1, :] * x,
                            preferred_element_type=jnp.float32)
    return acc  # (out_dim, hw_blk) f32


# ----------------------------------------------------------------------------
# Pass 1: per-batch BN partial statistics (no y written to HBM)
#   stats[b, o, 0] = sum_p y[b, o, p]
#   stats[b, o, 1] = sum_p y[b, o, p]^2
# ----------------------------------------------------------------------------
def _i2_stats_kernel(x_ref, g_ref, w_ref, bt_ref, stats_ref, *, hw, mask_tail):
    j = pl.program_id(1)

    @pl.when(j == 0)
    def _():
        stats_ref[...] = jnp.zeros_like(stats_ref)

    x = x_ref[0]                      # (in_dim, hw_blk)
    g = g_ref[0]                      # (K, hw_blk)
    acc = _mix_experts(x, g, w_ref, bt_ref)

    if mask_tail:
        # Zero out the padded tail lanes so they do not pollute mean/var.
        hw_blk = x.shape[-1]
        pos = j * hw_blk + jax.lax.broadcasted_iota(jnp.int32, (1, hw_blk), 1)
        acc = jnp.where(pos < hw, acc, 0.0)

    partial = jnp.concatenate(
        [jnp.sum(acc, axis=1, keepdims=True),
         jnp.sum(acc * acc, axis=1, keepdims=True)],
        axis=1)                                              # (out_dim, 2)
    stats_ref[0] = stats_ref[0] + partial                    # resident across j


# ----------------------------------------------------------------------------
# Pass 2: recompute the expert mix, apply folded BatchNorm + ReLU, write out once
#   out[b, o, p] = max(y[b, o, p] * scale[o] + shift[o], 0)
# ----------------------------------------------------------------------------
def _i2_out_kernel(x_ref, g_ref, w_ref, bt_ref, scale_ref, shift_ref, o_ref):
    acc = _mix_experts(x_ref[0], g_ref[0], w_ref, bt_ref)
    o_ref[0] = jnp.maximum(acc * scale_ref[...] + shift_ref[...], 0.0).astype(o_ref.dtype)


def _pick_hw_block(hw, target=8192):
    """Full hw if it fits, else a large lane-dense (multiple-of-128) block; tail handled by cdiv grid."""
    if hw <= target:
        return hw
    return target - (target % 128)


def i2layer_forward(x, g, W, bias, gamma, beta, eps=1e-5):
    """x: (bsz, in_dim, hw), g: (bsz, K, hw), W: (K, in_dim, out_dim), bias: (K, out_dim).

    Returns (bsz, out_dim, hw), matching the PyTorch module (BatchNorm1d training stats + ReLU).
    """
    bsz, in_dim, hw = x.shape
    K = g.shape[1]
    out_dim = W.shape[2]
    dtype = x.dtype

    hw_blk = _pick_hw_block(hw)
    nhw = pl.cdiv(hw, hw_blk)
    mask_tail = (hw % hw_blk) != 0

    # Tiny one-time parameter packing (XLA):
    #   W_res[k, o, i] = W[k, i, o]   -> (K, out_dim, in_dim)
    #   biasT[o, k]    = bias[k, o]   -> (out_dim, K)
    W_res = jnp.transpose(W, (0, 2, 1)).astype(dtype)
    biasT = jnp.transpose(bias, (1, 0)).astype(dtype)
    g = g.astype(dtype)

    # Block footprints are ~1 MiB even at hw_blk=8192; 48 MiB is safe on v7x (64 MiB physical).
    vmem_cap = 48 * 1024 * 1024

    stats = pl.pallas_call(
        functools.partial(_i2_stats_kernel, hw=hw, mask_tail=mask_tail),
        out_shape=jax.ShapeDtypeStruct((bsz, out_dim, 2), jnp.float32),
        grid=(bsz, nhw),
        in_specs=[
            pl.BlockSpec((1, in_dim, hw_blk), lambda b, j: (b, 0, j)),
            pl.BlockSpec((1, K, hw_blk), lambda b, j: (b, 0, j)),
            pl.BlockSpec((K, out_dim, in_dim), lambda b, j: (0, 0, 0)),   # resident weights
            pl.BlockSpec((out_dim, K), lambda b, j: (0, 0)),              # resident bias^T
        ],
        out_specs=pl.BlockSpec((1, out_dim, 2), lambda b, j: (b, 0, 0)),  # resident per-batch stats
        compiler_params=pltpu.CompilerParams(
            dimension_semantics=("parallel", "arbitrary"),
            vmem_limit_bytes=vmem_cap,
        ),
    )(x, g, W_res, biasT)

    # Fold training-mode BatchNorm1d (biased batch stats) into scale/shift (tiny, in XLA).
    ssum = jnp.sum(stats, axis=0)                         # (out_dim, 2) reduce over batch
    n = jnp.asarray(bsz * hw, jnp.float32)
    mean = ssum[:, 0] / n
    var = jnp.maximum(ssum[:, 1] / n - mean * mean, 0.0)
    inv = jax.lax.rsqrt(var + eps)
    gscale = gamma.astype(jnp.float32) * inv
    scale = gscale[:, None]                               # (out_dim, 1)
    shift = (beta.astype(jnp.float32) - mean * gscale)[:, None]

    out = pl.pallas_call(
        _i2_out_kernel,
        out_shape=jax.ShapeDtypeStruct((bsz, out_dim, hw), dtype),
        grid=(bsz, nhw),
        in_specs=[
            pl.BlockSpec((1, in_dim, hw_blk), lambda b, j: (b, 0, j)),
            pl.BlockSpec((1, K, hw_blk), lambda b, j: (b, 0, j)),
            pl.BlockSpec((K, out_dim, in_dim), lambda b, j: (0, 0, 0)),
            pl.BlockSpec((out_dim, K), lambda b, j: (0, 0)),
            pl.BlockSpec((out_dim, 1), lambda b, j: (0, 0)),
            pl.BlockSpec((out_dim, 1), lambda b, j: (0, 0)),
        ],
        out_specs=pl.BlockSpec((1, out_dim, hw_blk), lambda b, j: (b, 0, j)),
        compiler_params=pltpu.CompilerParams(
            dimension_semantics=("parallel", "parallel"),
            vmem_limit_bytes=vmem_cap,
        ),
    )(x, g, W_res, biasT, scale, shift)

    return out


def i2layer_reference(x, g, W, bias, gamma, beta, eps=1e-5):
    """Pure-JAX reference mirroring the PyTorch forward (BatchNorm1d in training mode)."""
    xt = jnp.transpose(x, (0, 2, 1))                            # (b, hw, in)
    gt = jnp.transpose(g, (0, 2, 1))                            # (b, hw, K)
    ys = jnp.einsum("bpi,kio->bpko", xt, W) + bias[None, None]  # (b, hw, K, out)
    y = jnp.sum(ys * gt[..., None], axis=2)                     # (b, hw, out)
    y = jnp.transpose(y, (0, 2, 1))                             # (b, out, hw)
    mean = jnp.mean(y, axis=(0, 2), keepdims=True)
    var = jnp.mean((y - mean) ** 2, axis=(0, 2), keepdims=True)
    y = (y - mean) / jnp.sqrt(var + eps)
    y = y * gamma[None, :, None] + beta[None, :, None]
    return jnp.maximum(y, 0.0)


if __name__ == "__main__":
    # small shapes consistent with the module: x:(bsz, in_dim, h*w), g:(bsz, K, h*w)
    bsz, in_dim, out_dim, K = 2, 4, 32, 3
    h = w = 16
    hw = h * w

    key = jax.random.PRNGKey(0)
    kx, kg, kw, kb = jax.random.split(key, 4)

    x = jax.random.normal(kx, (bsz, in_dim, hw), dtype=jnp.float32)
    g = jax.nn.softmax(jax.random.normal(kg, (bsz, K, hw), dtype=jnp.float32), axis=1)

    # deterministic synthetic parameters (W stored as (K, in_dim, out_dim) == torch W.T per expert)
    W = 0.1 * jax.random.normal(kw, (K, in_dim, out_dim), dtype=jnp.float32)
    bias = 0.1 * jax.random.normal(kb, (K, out_dim), dtype=jnp.float32)
    gamma = jnp.ones((out_dim,), jnp.float32)
    beta = jnp.zeros((out_dim,), jnp.float32)

    out = jax.block_until_ready(i2layer_forward(x, g, W, bias, gamma, beta))
    ref = jax.block_until_ready(i2layer_reference(x, g, W, bias, gamma, beta))

    assert out.shape == (bsz, out_dim, hw), out.shape
    np.testing.assert_allclose(np.asarray(out), np.asarray(ref), rtol=1e-4, atol=1e-4)
    print("KERNEL_OK")
</pallas_src>

<mosaic_0001>
module attributes {stable_mosaic.version = 11 : i64} {
  func.func @_i2_stats_kernel(%arg0: i32, %arg1: i32, %arg2: memref<1x4x256xf32, #tpu.memory_space<vmem>>, %arg3: memref<1x3x256xf32, #tpu.memory_space<vmem>>, %arg4: memref<3x32x4xf32, #tpu.memory_space<vmem>>, %arg5: memref<32x3xf32, #tpu.memory_space<vmem>>, %arg6: memref<1x32x2xf32, #tpu.memory_space<vmem>>) attributes {dimension_semantics = [#tpu.dimension_semantics<parallel>, #tpu.dimension_semantics<arbitrary>], iteration_bounds = array<i64: 2, 1>, scalar_prefetch = 0 : i64, scratch_operands = 0 : i64, tpu.core_type = #tpu.core_type<tc>, window_params = [{transform_indices = @transform_0, window_bounds = array<i64: 1, 4, 256>}, {transform_indices = @transform_1, window_bounds = array<i64: 1, 3, 256>}, {pipeline_mode = #tpu.pipeline_mode<synchronous>, transform_indices = @transform_2, window_bounds = array<i64: 3, 32, 4>}, {pipeline_mode = #tpu.pipeline_mode<synchronous>, transform_indices = @transform_3, window_bounds = array<i64: 32, 3>}, {transform_indices = @transform_4, window_bounds = array<i64: 1, 32, 2>}]} {
    %c0_i32 = arith.constant 0 : i32
    %0 = arith.cmpi eq, %arg1, %c0_i32 : i32
    %1 = arith.extui %0 : i1 to i32
    %c0_i32_0 = arith.constant 0 : i32
    %2 = arith.cmpi ne, %1, %c0_i32_0 : i32
    scf.if %2 {
      %cst_26 = arith.constant 0.000000e+00 : f32
      %42 = vector.broadcast %cst_26 : f32 to vector<1x32x2xf32>
      %c0_27 = arith.constant 0 : index
      %c0_28 = arith.constant 0 : index
      %c0_29 = arith.constant 0 : index
      %43 = vector.load %arg6[%c0_27, %c0_28, %c0_29] : memref<1x32x2xf32, #tpu.memory_space<vmem>>, vector<1x32x2xf32>
      tpu.vector_store %arg6[%c0_27, %c0_28, %c0_29], %42 {strides = array<i32>} : memref<1x32x2xf32, #tpu.memory_space<vmem>>, vector<1x32x2xf32>,
    } else {
    }
    %c0 = arith.constant 0 : index
    %c0_1 = arith.constant 0 : index
    %c0_2 = arith.constant 0 : index
    %3 = vector.load %arg2[%c0, %c0_1, %c0_2] : memref<1x4x256xf32, #tpu.memory_space<vmem>>, vector<1x4x256xf32>
    %4 = vector.shape_cast %3 : vector<1x4x256xf32> to vector<4x256xf32>
    %c0_3 = arith.constant 0 : index
    %c0_4 = arith.constant 0 : index
    %c0_5 = arith.constant 0 : index
    %5 = vector.load %arg3[%c0_3, %c0_4, %c0_5] : memref<1x3x256xf32, #tpu.memory_space<vmem>>, vector<1x3x256xf32>
    %6 = vector.shape_cast %5 : vector<1x3x256xf32> to vector<3x256xf32>
    %c0_6 = arith.constant 0 : index
    %c0_7 = arith.constant 0 : index
    %7 = vector.load %arg5[%c0_6, %c0_7] : memref<32x3xf32, #tpu.memory_space<vmem>>, vector<32x3xf32>
    %cst = arith.constant dense<0.000000e+00> : vector<32x256xf32>
    %8 = tpu.matmul %7, %6, %cst {dimension_numbers = #tpu.dot_dimension_numbers<[1], [0], [0], [1], [0, 0, 1, 1], [], []>} : vector<32x3xf32>, vector<3x256xf32>, vector<32x256xf32> -> vector<32x256xf32>
    %c0_8 = arith.constant 0 : index
    %c0_9 = arith.constant 0 : index
    %c0_10 = arith.constant 0 : index
    %9 = vector.load %arg4[%c0_8, %c0_9, %c0_10] : memref<3x32x4xf32, #tpu.memory_space<vmem>>, vector<1x32x4xf32>
    %10 = vector.shape_cast %9 : vector<1x32x4xf32> to vector<32x4xf32>
    %11 = vector.extract_strided_slice %6 {offsets = [0, 0], sizes = [1, 256], strides = [1, 1]} : vector<3x256xf32> to vector<1x256xf32>
    %12 = vector.broadcast %11 : vector<1x256xf32> to vector<4x256xf32>
    %13 = arith.mulf %12, %4 : vector<4x256xf32>
    %cst_11 = arith.constant dense<0.000000e+00> : vector<32x256xf32>
    %14 = tpu.matmul %10, %13, %cst_11 {dimension_numbers = #tpu.dot_dimension_numbers<[1], [0], [0], [1], [0, 0, 1, 1], [], []>} : vector<32x4xf32>, vector<4x256xf32>, vector<32x256xf32> -> vector<32x256xf32>
    %15 = arith.addf %8, %14 : vector<32x256xf32>
    %c1 = arith.constant 1 : index
    %c0_12 = arith.constant 0 : index
    %c0_13 = arith.constant 0 : index
    %16 = vector.load %arg4[%c1, %c0_12, %c0_13] : memref<3x32x4xf32, #tpu.memory_space<vmem>>, vector<1x32x4xf32>
    %17 = vector.shape_cast %16 : vector<1x32x4xf32> to vector<32x4xf32>
    %18 = vector.extract_strided_slice %6 {offsets = [1, 0], sizes = [1, 256], strides = [1, 1]} : vector<3x256xf32> to vector<1x256xf32>
    %19 = vector.broadcast %18 : vector<1x256xf32> to vector<4x256xf32>
    %20 = arith.mulf %19, %4 : vector<4x256xf32>
    %cst_14 = arith.constant dense<0.000000e+00> : vector<32x256xf32>
    %21 = tpu.matmul %17, %20, %cst_14 {dimension_numbers = #tpu.dot_dimension_numbers<[1], [0], [0], [1], [0, 0, 1, 1], [], []>} : vector<32x4xf32>, vector<4x256xf32>, vector<32x256xf32> -> vector<32x256xf32>
    %22 = arith.addf %15, %21 : vector<32x256xf32>
    %c2 = arith.constant 2 : index
    %c0_15 = arith.constant 0 : index
    %c0_16 = arith.constant 0 : index
    %23 = vector.load %arg4[%c2, %c0_15, %c0_16] : memref<3x32x4xf32, #tpu.memory_space<vmem>>, vector<1x32x4xf32>
    %24 = vector.shape_cast %23 : vector<1x32x4xf32> to vector<32x4xf32>
    %25 = vector.extract_strided_slice %6 {offsets = [2, 0], sizes = [1, 256], strides = [1, 1]} : vector<3x256xf32> to vector<1x256xf32>
    %26 = vector.broadcast %25 : vector<1x256xf32> to vector<4x256xf32>
    %27 = arith.mulf %26, %4 : vector<4x256xf32>
    %cst_17 = arith.constant dense<0.000000e+00> : vector<32x256xf32>
    %28 = tpu.matmul %24, %27, %cst_17 {dimension_numbers = #tpu.dot_dimension_numbers<[1], [0], [0], [1], [0, 0, 1, 1], [], []>} : vector<32x4xf32>, vector<4x256xf32>, vector<32x256xf32> -> vector<32x256xf32>
    %29 = arith.addf %22, %28 : vector<32x256xf32>
    %cst_18 = arith.constant dense<0.000000e+00> : vector<32xf32>
    %30 = vector.multi_reduction <add>, %29, %cst_18 [1] : vector<32x256xf32> to vector<32xf32>
    %31 = vector.shape_cast %30 : vector<32xf32> to vector<32x1xf32>
    %32 = arith.mulf %29, %29 : vector<32x256xf32>
    %cst_19 = arith.constant dense<0.000000e+00> : vector<32xf32>
    %33 = vector.multi_reduction <add>, %32, %cst_19 [1] : vector<32x256xf32> to vector<32xf32>
    %34 = vector.shape_cast %33 : vector<32xf32> to vector<32x1xf32>
    %35 = tpu.concatenate %31, %34 in 1 : vector<32x1xf32>, vector<32x1xf32> -> vector<32x2xf32>
    %c0_20 = arith.constant 0 : index
    %c0_21 = arith.constant 0 : index
    %c0_22 = arith.constant 0 : index
    %36 = vector.load %arg6[%c0_20, %c0_21, %c0_22] : memref<1x32x2xf32, #tpu.memory_space<vmem>>, vector<1x32x2xf32>
    %37 = vector.shape_cast %36 : vector<1x32x2xf32> to vector<32x2xf32>
    %38 = arith.addf %37, %35 : vector<32x2xf32>
    %c0_23 = arith.constant 0 : index
    %c0_24 = arith.constant 0 : index
    %c0_25 = arith.constant 0 : index
    %39 = vector.load %arg6[%c0_23, %c0_24, %c0_25] : memref<1x32x2xf32, #tpu.memory_space<vmem>>, vector<1x32x2xf32>
    %40 = vector.shape_cast %39 : vector<1x32x2xf32> to vector<32x2xf32>
    %41 = vector.shape_cast %38 : vector<32x2xf32> to vector<1x32x2xf32>
    tpu.vector_store %arg6[%c0_23, %c0_24, %c0_25], %41 {strides = array<i32>} : memref<1x32x2xf32, #tpu.memory_space<vmem>>, vector<1x32x2xf32>,
    return
  }
  func.func @transform_0(%arg0: i32, %arg1: i32) -> (i32, i32, i32) {
    %c0_i32 = arith.constant 0 : i32
    %c0_i32_0 = arith.constant 0 : i32
    return %arg0, %c0_i32, %arg1 : i32, i32, i32
  }
  func.func @transform_1(%arg0: i32, %arg1: i32) -> (i32, i32, i32) {
    %c0_i32 = arith.constant 0 : i32
    %c0_i32_0 = arith.constant 0 : i32
    return %arg0, %c0_i32, %arg1 : i32, i32, i32
  }
  func.func @transform_2(%arg0: i32, %arg1: i32) -> (i32, i32, i32) {
    %c0_i32 = arith.constant 0 : i32
    %c0_i32_0 = arith.constant 0 : i32
    %c0_i32_1 = arith.constant 0 : i32
    %c0_i32_2 = arith.constant 0 : i32
    return %c0_i32, %c0_i32_0, %c0_i32_1 : i32, i32, i32
  }
  func.func @transform_3(%arg0: i32, %arg1: i32) -> (i32, i32) {
    %c0_i32 = arith.constant 0 : i32
    %c0_i32_0 = arith.constant 0 : i32
    %c0_i32_1 = arith.constant 0 : i32
    return %c0_i32, %c0_i32_0 : i32, i32
  }
  func.func @transform_4(%arg0: i32, %arg1: i32) -> (i32, i32, i32) {
    %c0_i32 = arith.constant 0 : i32
    %c0_i32_0 = arith.constant 0 : i32
    %c0_i32_1 = arith.constant 0 : i32
    return %arg0, %c0_i32, %c0_i32_0 : i32, i32, i32
  }
}

</mosaic_0001>

<llo_original>
// kernel: tpu_custom_call.1
$region0: #{tpu_custom_call.1}
  #allocation0 [shape = 'u32[]', space=smem, size = 0x4, offset = 0x4, fixed_abs, tag = 'smem constant byte address 0x4 - core index']
  #allocation1 [shape = 'u32[144,128]{1,0:T(1,128)}', space=vmem, size = 0x12000, scoped, tag = 'internal scratch']
  %s0 = inlined_call_operand.vmem [shape: f32[2,4,256], index: 0, kind: input, shape index: {}]
  %s1 = inlined_call_operand.vmem [shape: f32[2,3,256], index: 1, kind: input, shape index: {}]
  %s2 = inlined_call_operand.vmem [shape: f32[3,32,4], index: 2, kind: input, shape index: {}]
  %s3 = inlined_call_operand.vmem [shape: f32[32,3], index: 3, kind: input, shape index: {}]
  %s4 = inlined_call_operand.vmem [shape: f32[2,32,2], index: 4, kind: output, shape index: {}]
  %s5 = sld [smem:[#allocation0]]
  $region53: #{tpu_custom_call.1} parent=0
    _
  %s7 = ssub.s32 1, %s5
  %s8 = scalar_select 0, %s7, %s5
  loop: start=0, step=1, limit=4
  $region2: #{tpu_custom_call.1} parent=0 // loop_pre_header
    _
  $region3: #{tpu_custom_call.1} parent=0 // loop_header
    %s10 = sphi 0, %s14
    %p11 = scmp.ge.s32.totalorder %s10, 4
    %s17 = sphi 0, %s29
    %s18 = sphi 0, %s25
    %s19 = sphi 0, %s17
    %s20 = sphi 0, %s18
    %s21 = sphi 0, %s19
    %s22 = sphi 0, %s20
    %s34 = sphi 0, %s36
    %s37 = sphi 0, %s34
    %s38 = sphi 0, %s37
    %s54 = sphi 0, %s38
    %s62 = sphi 0, %s64
    %s65 = sphi 0, %s62
    %s66 = sphi 0, %s65
    %s82 = sphi 0, %s66
    %s86 = sphi 0, %s86
    %s88 = sphi 0, %s86
    %s89 = sphi 0, %s88
    %s103 = sphi 0, %s89
    %s107 = sphi 0, %s107
    %s109 = sphi 0, %s107
    %s110 = sphi 0, %s109
    %s124 = sphi 0, %s110
    %s130 = sphi 0, %s132
    %s133 = sphi 0, %s130
    %s134 = sphi 0, %s133
    %s150 = sphi 0, %s134
  $region4: #{tpu_custom_call.1} parent=0 // loop_header_branch
    %13 = sbr.rel (%p11) target = $region8
  $region5: #{tpu_custom_call.1} parent=0 // loop_body
    %s15 = ssub.s32 %s10, 1
    %s16 = ssub.s32 %s10, 2
    %s23 = sadd.s32 1, %s18
    %p24 = scmp.ge.s32.totalorder %s23, 1
    %s25 = scalar_select %p24, 0, %s23
    %s26 = sadd.s32 1, %s17
    %s27 = scalar_select %p24, %s26, %s17
    %p28 = scmp.ge.s32.totalorder %s27, 2
    %s29 = scalar_select %p28, 0, %s27
    %s30 = ssub.s32 %s17, %s29
    %s31 = ssub.s32 %s18, %s25
    %s32 = sor.u32 %s30, %s31
    %p33 = scmp.eq.s32.totalorder %s32, 0
    %s35 = sadd.s32 %s34, 1
    %s36 = scalar_select %p33, %s34, %s35
    %p39 = pneg %p33
    %p40 = scmp.eq.s32.totalorder %s10, 1
    %p41 = por %p39, %p40
    %p42 = scmp.ne.s32.totalorder %s34, %s37
    %p43 = scmp.eq.s32.totalorder %s10, 0
    %p44 = por %p42, %p43
    %p45 = scmp.ne.s32.totalorder %s34, %s37
    %p46 = scmp.eq.s32.totalorder %s15, 1
    %p47 = por %p45, %p46
    %p48 = scmp.ne.s32.totalorder %s37, %s38
    %p49 = scmp.eq.s32.totalorder %s15, 0
    %p50 = por %p48, %p49
    %p51 = scmp.ne.s32.totalorder %s37, %s38
    %p52 = scmp.eq.s32.totalorder %s16, 1
    %p53 = por %p51, %p52
    %p55 = scmp.ne.s32.totalorder %s38, %s54
    %p56 = scmp.eq.s32.totalorder %s16, 0
    %p57 = por %p55, %p56
    %s58 = ssub.s32 %s17, %s29
    %s59 = ssub.s32 %s18, %s25
    %s60 = sor.u32 %s58, %s59
    %p61 = scmp.eq.s32.totalorder %s60, 0
    %s63 = sadd.s32 %s62, 1
    %s64 = scalar_select %p61, %s62, %s63
    %p67 = pneg %p61
    %p68 = scmp.eq.s32.totalorder %s10, 1
    %p69 = por %p67, %p68
    %p70 = scmp.ne.s32.totalorder %s62, %s65
    %p71 = scmp.eq.s32.totalorder %s10, 0
    %p72 = por %p70, %p71
    %p73 = scmp.ne.s32.totalorder %s62, %s65
    %p74 = scmp.eq.s32.totalorder %s15, 1
    %p75 = por %p73, %p74
    %p76 = scmp.ne.s32.totalorder %s65, %s66
    %p77 = scmp.eq.s32.totalorder %s15, 0
    %p78 = por %p76, %p77
    %p79 = scmp.ne.s32.totalorder %s65, %s66
    %p80 = scmp.eq.s32.totalorder %s16, 1
    %p81 = por %p79, %p80
    %p83 = scmp.ne.s32.totalorder %s66, %s82
    %p84 = scmp.eq.s32.totalorder %s16, 0
    %p85 = por %p83, %p84
    %s87 = sadd.s32 %s86, 1
    %p90 = scmp.eq.s32.totalorder %s10, 1
    %p91 = scmp.ne.s32.totalorder %s86, %s88
    %p92 = scmp.eq.s32.totalorder %s10, 0
    %p93 = por %p91, %p92
    %p94 = scmp.ne.s32.totalorder %s86, %s88
    %p95 = scmp.eq.s32.totalorder %s15, 1
    %p96 = por %p94, %p95
    %p97 = scmp.ne.s32.totalorder %s88, %s89
    %p98 = scmp.eq.s32.totalorder %s15, 0
    %p99 = por %p97, %p98
    %p100 = scmp.ne.s32.totalorder %s88, %s89
    %p101 = scmp.eq.s32.totalorder %s16, 1
    %p102 = por %p100, %p101
    %p104 = scmp.ne.s32.totalorder %s89, %s103
    %p105 = scmp.eq.s32.totalorder %s16, 0
    %p106 = por %p104, %p105
    %s108 = sadd.s32 %s107, 1
    %p111 = scmp.eq.s32.totalorder %s10, 1
    %p112 = scmp.ne.s32.totalorder %s107, %s109
    %p113 = scmp.eq.s32.totalorder %s10, 0
    %p114 = por %p112, %p113
    %p115 = scmp.ne.s32.totalorder %s107, %s109
    %p116 = scmp.eq.s32.totalorder %s15, 1
    %p117 = por %p115, %p116
    %p118 = scmp.ne.s32.totalorder %s109, %s110
    %p119 = scmp.eq.s32.totalorder %s15, 0
    %p120 = por %p118, %p119
    %p121 = scmp.ne.s32.totalorder %s109, %s110
    %p122 = scmp.eq.s32.totalorder %s16, 1
    %p123 = por %p121, %p122
    %p125 = scmp.ne.s32.totalorder %s110, %s124
    %p126 = scmp.eq.s32.totalorder %s16, 0
    %p127 = por %p125, %p126
    %s128 = ssub.s32 %s17, %s29
    %p129 = scmp.eq.s32.totalorder %s128, 0
    %s131 = sadd.s32 %s130, 1
    %s132 = scalar_select %p129, %s130, %s131
    %p135 = pneg %p129
    %p136 = scmp.eq.s32.totalorder %s10, 1
    %p137 = por %p135, %p136
    %p138 = scmp.ne.s32.totalorder %s130, %s133
    %p139 = scmp.eq.s32.totalorder %s10, 0
    %p140 = por %p138, %p139
    %p141 = scmp.ne.s32.totalorder %s130, %s133
    %p142 = scmp.eq.s32.totalorder %s15, 1
    %p143 = por %p141, %p142
    %p144 = scmp.ne.s32.totalorder %s133, %s134
    %p145 = scmp.eq.s32.totalorder %s15, 0
    %p146 = por %p144, %p145
    %p147 = scmp.ne.s32.totalorder %s133, %s134
    %p148 = scmp.eq.s32.totalorder %s16, 1
    %p149 = por %p147, %p148
    %p151 = scmp.ne.s32.totalorder %s134, %s150
    %p152 = scmp.eq.s32.totalorder %s16, 0
    %p153 = por %p151, %p152
    %p154 = scmp.le.s32.totalorder 1, %s10
    %p155 = scmp.lt.s32.totalorder %s10, 3
    %p156 = pnand %p154, %p155
    %p157 = pneg %p156
    // Predicated region
    $region9: #{tpu_custom_call.1} parent=5 // pred_check
      _
    $region10: #{tpu_custom_call.1} parent=5 // pred_check_branch
      %159 = sbr.rel (%p156) target = $region12
    $region11: #{tpu_custom_call.1} parent=5 // pred_region
      %s160 = ssub.s32 %s10, 1
      // Predicated region
      $region13: #{tpu_custom_call.1} parent=11 // pred_check
        %p161 = pneg %p99
      $region14: #{tpu_custom_call.1} parent=11 // pred_check_branch
        %163 = sbr.rel (%p161) target = $region16
      $region15: #{tpu_custom_call.1} parent=11 // pred_region
        _
      $region16: #{tpu_custom_call.1} parent=11 // pred_fallthru
        _
      // Predicated region
      $region17: #{tpu_custom_call.1} parent=11 // pred_check
        %p164 = pneg %p120
      $region18: #{tpu_custom_call.1} parent=11 // pred_check_branch
        %166 = sbr.rel (%p164) target = $region20
      $region19: #{tpu_custom_call.1} parent=11 // pred_region
        _
      $region20: #{tpu_custom_call.1} parent=11 // pred_fallthru
        _
    $region12: #{tpu_custom_call.1} parent=5 // pred_fallthru
      _
    %p167 = scmp.lt.s32.totalorder %s10, 2
    // Predicated region
    $region21: #{tpu_custom_call.1} parent=5 // pred_check
      %p168 = pneg %p167
    $region22: #{tpu_custom_call.1} parent=5 // pred_check_branch
      %170 = sbr.rel (%p168) target = $region24
    $region23: #{tpu_custom_call.1} parent=5 // pred_region
      // Predicated region
      $region25: #{tpu_custom_call.1} parent=23 // pred_check
        %p171 = pneg %p44
      $region26: #{tpu_custom_call.1} parent=23 // pred_check_branch
        %173 = sbr.rel (%p171) target = $region28
      $region27: #{tpu_custom_call.1} parent=23 // pred_region
        %s174 = smul.u32 2, %s18
        %p175 = scmp.lt.s32.totalorder %s17, 1
        %s176 = scalar_select %p175, %s17, 1
        %p177 = scmp.lt.s32.totalorder %s174, 1
        %s178 = scalar_select %p177, %s174, 1
        %s179 = smul.addr %s176, 2
        %s180 = sadd.s32 %s178, %s179
        %s181 = smul.addr %s180, 4
        %s182 = scalar_lea.vmem %s0, %s181
        %s183 = smul.u32 2, %s18
      $region28: #{tpu_custom_call.1} parent=23 // pred_fallthru
        _
      // Predicated region
      $region29: #{tpu_custom_call.1} parent=23 // pred_check
        %p184 = pneg %p72
      $region30: #{tpu_custom_call.1} parent=23 // pred_check_branch
        %186 = sbr.rel (%p184) target = $region32
      $region31: #{tpu_custom_call.1} parent=23 // pred_region
        %s187 = smul.u32 2, %s18
        %p188 = scmp.lt.s32.totalorder %s17, 1
        %s189 = scalar_select %p188, %s17, 1
        %p190 = scmp.lt.s32.totalorder %s187, 1
        %s191 = scalar_select %p190, %s187, 1
        %s192 = smul.addr %s189, 2
        %s193 = sadd.s32 %s191, %s192
        %s194 = smul.addr %s193, 4
        %s195 = scalar_lea.vmem %s1, %s194
        %s196 = smul.u32 2, %s18
      $region32: #{tpu_custom_call.1} parent=23 // pred_fallthru
        _
    $region24: #{tpu_custom_call.1} parent=5 // pred_fallthru
      _
    %p197 = scmp.le.s32.totalorder 1, %s10
    %p198 = scmp.lt.s32.totalorder %s10, 3
    %p199 = pnand %p197, %p198
    %p200 = pneg %p199
    // Predicated region
    $region33: #{tpu_custom_call.1} parent=5 // pred_check
      _
    $region34: #{tpu_custom_call.1} parent=5 // pred_check_branch
      %202 = sbr.rel (%p199) target = $region36
    $region35: #{tpu_custom_call.1} parent=5 // pred_region
      %s203 = ssub.s32 %s10, 1
      %s204 = smul.u32 2, %s20
      %p205 = scmp.lt.s32.totalorder %s19, 1
      %s206 = scalar_select %p205, %s19, 1
      %p207 = scmp.lt.s32.totalorder %s204, 1
      %s208 = scalar_select %p207, %s204, 1
      %s209 = smul.addr %s206, 2
      %s210 = sadd.s32 %s208, %s209
      %s211 = smul.addr %s210, 4
      %s212 = scalar_lea.vmem %s0, %s211
      %p213 = pneg %p50
      %p214 = pneg %p47
      %s215 = smul.u32 2, %s20
      %p216 = scmp.lt.s32.totalorder %s19, 1
      %s217 = scalar_select %p216, %s19, 1
      %p218 = scmp.lt.s32.totalorder %s215, 1
      %s219 = scalar_select %p218, %s215, 1
      %s220 = smul.addr %s217, 2
      %s221 = sadd.s32 %s219, %s220
      %s222 = smul.addr %s221, 4
      %s223 = scalar_lea.vmem %s1, %s222
      %p224 = pneg %p78
      %p225 = pneg %p75
      %p226 = pneg %p99
      %p227 = pneg %p96
      %p228 = pneg %p120
      %p229 = pneg %p117
      %p230 = pneg %p146
      %p231 = pneg %p143
      %p232 = scmp.lt.s32.totalorder %s19, 1
      %s233 = scalar_select %p232, %s19, 1
      %s234 = smul.addr %s233, 4
      %s235 = smul.addr %s234, 8
      %s236 = scalar_lea.vmem %s4, %s235
      %s237 = smul.u32 2, %s20
      %p238 = scmp.lt.s32.totalorder %s19, 1
      %s239 = scalar_select %p238, %s19, 1
      %p240 = scmp.lt.s32.totalorder %s237, 1
      %s241 = scalar_select %p240, %s237, 1
      %s242 = smul.addr %s239, 2
      %s243 = sadd.s32 %s241, %s242
      %s244 = smul.addr %s243, 4
      %s245 = scalar_lea.vmem %s0, %s244
      %s246 = smul.u32 2, %s20
      %s247 = smul.u32 2, %s20
      %p248 = scmp.lt.s32.totalorder %s19, 1
      %s249 = scalar_select %p248, %s19, 1
      %p250 = scmp.lt.s32.totalorder %s247, 1
      %s251 = scalar_select %p250, %s247, 1
      %s252 = smul.addr %s249, 2
      %s253 = sadd.s32 %s251, %s252
      %s254 = smul.addr %s253, 4
      %s255 = scalar_lea.vmem %s1, %s254
      %s256 = smul.u32 2, %s20
      %p257 = scmp.lt.s32.totalorder %s19, 1
      %s258 = scalar_select %p257, %s19, 1
      %s259 = smul.addr %s258, 4
      %s260 = smul.addr %s259, 8
      %s261 = scalar_lea.vmem %s4, %s260
      %p262 = scmp.eq.s32.totalorder %s20, 0
      // Predicated region
      $region37: #{tpu_custom_call.1} parent=35 // pred_check
        %p263 = pneg %p262
      $region38: #{tpu_custom_call.1} parent=35 // pred_check_branch
        %265 = sbr.rel (%p263) target = $region40
      $region39: #{tpu_custom_call.1} parent=35 // pred_region
        %vm266 = vcmask 15360
        %267 = vst.msk [vmem:[%s261] sm:$0xff] %vm266, 0.0
        %268 = vst.msk [vmem:[%s261 + $0x8] sm:$0xff] %vm266, 0.0
        %269 = vst.msk [vmem:[%s261 + $0x10] sm:$0xff] %vm266, 0.0
        %270 = vst.msk [vmem:[%s261 + $0x18] sm:$0xff] %vm266, 0.0
      $region40: #{tpu_custom_call.1} parent=35 // pred_fallthru
        _
      %v271 = vld [vmem:[%s245] sm:$0xff]
      %v272 = vld [vmem:[%s255] sm:$0x77]
      %v273 = vld [vmem:[%s3] sm:$0xff]
      %v274 = vld [vmem:[%s3 + $0x8] sm:$0xff]
      %v275 = vld [vmem:[%s3 + $0x10] sm:$0xff]
      %v276 = vld [vmem:[%s3 + $0x18] sm:$0xff]
      %v277 = vld [vmem:[%s2] sm:$0xff]
      %v278 = vld [vmem:[%s2 + $0x8] sm:$0xff]
      %v279 = vld [vmem:[%s2 + $0x10] sm:$0xff]
      %v280 = vld [vmem:[%s2 + $0x18] sm:$0xff]
      %v282 = vlaneseq
      %v283 = vshrl.u32 %v282, 7
      %v284 = vsub.s32 0, %v283
      %v285 = vrot.slane %v272, %v284
      %v286 = vlaneseq
      %v287 = vshrl.u32 %v286, 7
      %v288 = vsub.s32 4, %v287
      %v289 = vrot.slane %v272, %v288
      %v292 = vlaneseq
      %v293 = vshrl.u32 %v292, 7
      %v294 = vsub.s32 0, %v293
      %v295 = vrot.slane %v285, %v294
      %v296 = vlaneseq
      %v297 = vshrl.u32 %v296, 7
      %v298 = vsub.s32 0, %v297
      %v299 = vrot.slane %v289, %v298
      %v301 = vcombine.high %v271, %v271
      %v303 = vmul.f32 %v295, %v271
      %v304 = vmul.f32 %v299, %v301
      %vm305 = vcmask 31744
      %v307 = vsel %vm305, %v277, 0
      %v310 = vsel %vm305, %v278, 0
      %v313 = vsel %vm305, %v279, 0
      %v316 = vsel %vm305, %v280, 0
      %vm318 = vcmask 1043456
      %v320 = vsel %vm318, %v303, 0
      %v323 = vsel %vm318, %v304, 0
      %325 = vmatprep.subr.mxu0 0.0
      %326 = vmatpush1.msra.mxu0 0.0
      %327 = vmatprep.subr.mxu0 0.0
      %328 = vmatpush1.msra.mxu0 0.0
      %329 = vmatprep.subr.mxu0 0.0
      %330 = vmatpush1.msra.mxu0 0.0
      %331 = vmatprep.subr.mxu0 0.0
      %332 = vmatpush1.msra.mxu0 0.0
      %333 = vmatprep.subr.mxu0 0.0
      %334 = vmatpush1.msra.mxu0 0.0
      %335 = vmatprep.subr.mxu0 0.0
      %336 = vmatpush1.msra.mxu0 0.0
      %337 = vmatprep.subr.mxu0 0.0
      %338 = vmatpush1.msra.mxu0 0.0
      %339 = vmatprep.subr.mxu0 0.0
      %340 = vmatpush1.msra.mxu0 0.0
      %341 = vmatprep.subr.mxu0 0.0
      %342 = vmatpush1.msra.mxu0 0.0
      %343 = vmatprep.subr.mxu0 0.0
      %344 = vmatpush1.msra.mxu0 0.0
      %345 = vmatprep.subr.mxu0 0.0
      %346 = vmatpush1.msra.mxu0 0.0
      %347 = vmatprep.subr.mxu0 0.0
      %348 = vmatpush1.msra.mxu0 0.0
      %349 = vmatprep.subr.mxu0 0.0
      %350 = vmatpush1.msra.mxu0 0.0
      %351 = vmatprep.subr.mxu0 0.0
      %352 = vmatpush1.msra.mxu0 0.0
      %353 = vmatprep.subr.mxu0 0.0
      %354 = vmatpush1.msra.mxu0 0.0
      %355 = vmatprep.subr.mxu0 %v323
      %356 = vmatpush1.msra.mxu0 %v320
      %357 = vmatprep.subr.mxu0 0.0
      %358 = vmatpush2.msra.mxu0 0.0
      %359 = vmatprep.subr.mxu0 0.0
      %360 = vmatpush2.msra.mxu0 0.0
      %361 = vmatprep.subr.mxu0 0.0
      %362 = vmatpush2.msra.mxu0 0.0
      %363 = vmatprep.subr.mxu0 0.0
      %364 = vmatpush2.msra.mxu0 0.0
      %365 = vmatprep.subr.mxu0 0.0
      %366 = vmatpush2.msra.mxu0 0.0
      %367 = vmatprep.subr.mxu0 0.0
      %368 = vmatpush2.msra.mxu0 0.0
      %369 = vmatprep.subr.mxu0 0.0
      %370 = vmatpush2.msra.mxu0 0.0
      %371 = vmatprep.subr.mxu0 0.0
      %372 = vmatpush2.msra.mxu0 0.0
      %373 = vmatprep.subr.mxu0 0.0
      %374 = vmatpush2.msra.mxu0 0.0
      %375 = vmatprep.subr.mxu0 0.0
      %376 = vmatpush2.msra.mxu0 0.0
      %377 = vmatprep.subr.mxu0 0.0
      %378 = vmatpush2.msra.mxu0 0.0
      %379 = vmatprep.subr.mxu0 0.0
      %380 = vmatpush2.msra.mxu0 0.0
      %381 = vmatprep.subr.mxu0 0.0
      %382 = vmatpush2.msra.mxu0 0.0
      %383 = vmatprep.subr.mxu0 0.0
      %384 = vmatpush2.msra.mxu0 0.0
      %385 = vmatprep.subr.mxu0 0.0
      %386 = vmatpush2.msra.mxu0 0.0
      %387 = vmatprep.subr.mxu0 0.0
      %388 = vmatpush2.msra.mxu0 0.0
      %389 = vmatprep.mubr.f32.mxu0 0.0
      %390 = vmatmul.mubr.f32.gmra.mxu0 %v307
      %v391 = vpop.f32.mrf.mxu0
      %v392 = vadd.f32 0.0, %v391
      %v393 = vpop.f32.mrf.mxu0
      %v394 = vadd.f32 0.0, %v393
      %395 = vmatprep.mubr.f32.mxu0 0.0
      %396 = vmatmul.mubr.f32.gmra.mxu0 %v310
      %v397 = vpop.f32.mrf.mxu0
      %v398 = vadd.f32 0.0, %v397
      %v399 = vpop.f32.mrf.mxu0
      %v400 = vadd.f32 0.0, %v399
      %401 = vmatprep.mubr.f32.mxu0 0.0
      %402 = vmatmul.mubr.f32.gmra.mxu0 %v313
      %v403 = vpop.f32.mrf.mxu0
      %v404 = vadd.f32 0.0, %v403
      %v405 = vpop.f32.mrf.mxu0
      %v406 = vadd.f32 0.0, %v405
      %407 = vmatprep.mubr.f32.mxu0 0.0
      %408 = vmatmul.mubr.f32.gmra.mxu0 %v316
      %v409 = vpop.f32.mrf.mxu0
      %v410 = vadd.f32 0.0, %v409
      %v411 = vpop.f32.mrf.mxu0
      %v412 = vadd.f32 0.0, %v411
      %413 = vdwg.mxu0
      %v414 = vcombine.high %v272, %v272
      %vm415 = vcmask 23552
      %v417 = vsel %vm415, %v273, 0
      %v420 = vsel %vm415, %v274, 0
      %v423 = vsel %vm415, %v275, 0
      %v426 = vsel %vm415, %v276, 0
      %vm428 = vcmask 1042432
      %v429 = vsel %vm428, %v272, 0
      %v431 = vsel %vm428, %v414, 0
      %433 = vmatprep.subr.mxu0 0.0
      %434 = vmatpush1.msra.mxu0 0.0
      %435 = vmatprep.subr.mxu0 0.0
      %436 = vmatpush1.msra.mxu0 0.0
      %437 = vmatprep.subr.mxu0 0.0
      %438 = vmatpush1.msra.mxu0 0.0
      %439 = vmatprep.subr.mxu0 0.0
      %440 = vmatpush1.msra.mxu0 0.0
      %441 = vmatprep.subr.mxu0 0.0
      %442 = vmatpush1.msra.mxu0 0.0
      %443 = vmatprep.subr.mxu0 0.0
      %444 = vmatpush1.msra.mxu0 0.0
      %445 = vmatprep.subr.mxu0 0.0
      %446 = vmatpush1.msra.mxu0 0.0
      %447 = vmatprep.subr.mxu0 0.0
      %448 = vmatpush1.msra.mxu0 0.0
      %449 = vmatprep.subr.mxu0 0.0
      %450 = vmatpush1.msra.mxu0 0.0
      %451 = vmatprep.subr.mxu0 0.0
      %452 = vmatpush1.msra.mxu0 0.0
      %453 = vmatprep.subr.mxu0 0.0
      %454 = vmatpush1.msra.mxu0 0.0
      %455 = vmatprep.subr.mxu0 0.0
      %456 = vmatpush1.msra.mxu0 0.0
      %457 = vmatprep.subr.mxu0 0.0
      %458 = vmatpush1.msra.mxu0 0.0
      %459 = vmatprep.subr.mxu0 0.0
      %460 = vmatpush1.msra.mxu0 0.0
      %461 = vmatprep.subr.mxu0 0.0
      %462 = vmatpush1.msra.mxu0 0.0
      %463 = vmatprep.subr.mxu0 %v431
      %464 = vmatpush1.msra.mxu0 %v429
      %465 = vmatprep.subr.mxu0 0.0
      %466 = vmatpush2.msra.mxu0 0.0
      %467 = vmatprep.subr.mxu0 0.0
      %468 = vmatpush2.msra.mxu0 0.0
      %469 = vmatprep.subr.mxu0 0.0
      %470 = vmatpush2.msra.mxu0 0.0
      %471 = vmatprep.subr.mxu0 0.0
      %472 = vmatpush2.msra.mxu0 0.0
      %473 = vmatprep.subr.mxu0 0.0
      %474 = vmatpush2.msra.mxu0 0.0
      %475 = vmatprep.subr.mxu0 0.0
      %476 = vmatpush2.msra.mxu0 0.0
      %477 = vmatprep.subr.mxu0 0.0
      %478 = vmatpush2.msra.mxu0 0.0
      %479 = vmatprep.subr.mxu0 0.0
      %480 = vmatpush2.msra.mxu0 0.0
      %481 = vmatprep.subr.mxu0 0.0
      %482 = vmatpush2.msra.mxu0 0.0
      %483 = vmatprep.subr.mxu0 0.0
      %484 = vmatpush2.msra.mxu0 0.0
      %485 = vmatprep.subr.mxu0 0.0
      %486 = vmatpush2.msra.mxu0 0.0
      %487 = vmatprep.subr.mxu0 0.0
      %488 = vmatpush2.msra.mxu0 0.0
      %489 = vmatprep.subr.mxu0 0.0
      %490 = vmatpush2.msra.mxu0 0.0
      %491 = vmatprep.subr.mxu0 0.0
      %492 = vmatpush2.msra.mxu0 0.0
      %493 = vmatprep.subr.mxu0 0.0
      %494 = vmatpush2.msra.mxu0 0.0
      %495 = vmatprep.subr.mxu0 0.0
      %496 = vmatpush2.msra.mxu0 0.0
      %497 = vmatprep.mubr.f32.mxu0 0.0
      %498 = vmatmul.mubr.f32.gmra.mxu0 %v417
      %v499 = vpop.f32.mrf.mxu0
      %v500 = vadd.f32 %v392, %v499
      %v501 = vpop.f32.mrf.mxu0
      %v502 = vadd.f32 %v394, %v501
      %503 = vmatprep.mubr.f32.mxu0 0.0
      %504 = vmatmul.mubr.f32.gmra.mxu0 %v420
      %v505 = vpop.f32.mrf.mxu0
      %v506 = vadd.f32 %v398, %v505
      %v507 = vpop.f32.mrf.mxu0
      %v508 = vadd.f32 %v400, %v507
      %509 = vmatprep.mubr.f32.mxu0 0.0
      %510 = vmatmul.mubr.f32.gmra.mxu0 %v423
      %v511 = vpop.f32.mrf.mxu0
      %v512 = vadd.f32 %v404, %v511
      %v513 = vpop.f32.mrf.mxu0
      %v514 = vadd.f32 %v406, %v513
      %515 = vmatprep.mubr.f32.mxu0 0.0
      %516 = vmatmul.mubr.f32.gmra.mxu0 %v426
      %v517 = vpop.f32.mrf.mxu0
      %v518 = vadd.f32 %v410, %v517
      %v519 = vpop.f32.mrf.mxu0
      %v520 = vadd.f32 %v412, %v519
      %521 = vdwg.mxu0
      %s522 = scalar_lea.vmem %s2, 32
      %v523 = vld [vmem:[%s522] sm:$0xff]
      %v524 = vld [vmem:[%s522 + $0x8] sm:$0xff]
      %v525 = vld [vmem:[%s522 + $0x10] sm:$0xff]
      %v526 = vld [vmem:[%s522 + $0x18] sm:$0xff]
      %v527 = vlaneseq
      %v528 = vshrl.u32 %v527, 7
      %v529 = vsub.s32 1, %v528
      %v530 = vrot.slane %v272, %v529
      %v531 = vlaneseq
      %v532 = vshrl.u32 %v531, 7
      %v533 = vsub.s32 5, %v532
      %v534 = vrot.slane %v272, %v533
      %v537 = vlaneseq
      %v538 = vshrl.u32 %v537, 7
      %v539 = vsub.s32 1, %v538
      %v540 = vrot.slane %v530, %v539
      %v541 = vlaneseq
      %v542 = vshrl.u32 %v541, 7
      %v543 = vsub.s32 1, %v542
      %v544 = vrot.slane %v534, %v543
      %v545 = vmul.f32 %v540, %v271
      %v546 = vmul.f32 %v544, %v301
      %v548 = vsel %vm305, %v523, 0
      %v551 = vsel %vm305, %v524, 0
      %v554 = vsel %vm305, %v525, 0
      %v557 = vsel %vm305, %v526, 0
      %v560 = vsel %vm318, %v545, 0
      %v563 = vsel %vm318, %v546, 0
      %565 = vmatprep.subr.mxu0 0.0
      %566 = vmatpush1.msra.mxu0 0.0
      %567 = vmatprep.subr.mxu0 0.0
      %568 = vmatpush1.msra.mxu0 0.0
      %569 = vmatprep.subr.mxu0 0.0
      %570 = vmatpush1.msra.mxu0 0.0
      %571 = vmatprep.subr.mxu0 0.0
      %572 = vmatpush1.msra.mxu0 0.0
      %573 = vmatprep.subr.mxu0 0.0
      %574 = vmatpush1.msra.mxu0 0.0
      %575 = vmatprep.subr.mxu0 0.0
      %576 = vmatpush1.msra.mxu0 0.0
      %577 = vmatprep.subr.mxu0 0.0
      %578 = vmatpush1.msra.mxu0 0.0
      %579 = vmatprep.subr.mxu0 0.0
      %580 = vmatpush1.msra.mxu0 0.0
      %581 = vmatprep.subr.mxu0 0.0
      %582 = vmatpush1.msra.mxu0 0.0
      %583 = vmatprep.subr.mxu0 0.0
      %584 = vmatpush1.msra.mxu0 0.0
      %585 = vmatprep.subr.mxu0 0.0
      %586 = vmatpush1.msra.mxu0 0.0
      %587 = vmatprep.subr.mxu0 0.0
      %588 = vmatpush1.msra.mxu0 0.0
      %589 = vmatprep.subr.mxu0 0.0
      %590 = vmatpush1.msra.mxu0 0.0
      %591 = vmatprep.subr.mxu0 0.0
      %592 = vmatpush1.msra.mxu0 0.0
      %593 = vmatprep.subr.mxu0 0.0
      %594 = vmatpush1.msra.mxu0 0.0
      %595 = vmatprep.subr.mxu0 %v563
      %596 = vmatpush1.msra.mxu0 %v560
      %597 = vmatprep.subr.mxu0 0.0
      %598 = vmatpush2.msra.mxu0 0.0
      %599 = vmatprep.subr.mxu0 0.0
      %600 = vmatpush2.msra.mxu0 0.0
      %601 = vmatprep.subr.mxu0 0.0
      %602 = vmatpush2.msra.mxu0 0.0
      %603 = vmatprep.subr.mxu0 0.0
      %604 = vmatpush2.msra.mxu0 0.0
      %605 = vmatprep.subr.mxu0 0.0
      %606 = vmatpush2.msra.mxu0 0.0
      %607 = vmatprep.subr.mxu0 0.0
      %608 = vmatpush2.msra.mxu0 0.0
      %609 = vmatprep.subr.mxu0 0.0
      %610 = vmatpush2.msra.mxu0 0.0
      %611 = vmatprep.subr.mxu0 0.0
      %612 = vmatpush2.msra.mxu0 0.0
      %613 = vmatprep.subr.mxu0 0.0
      %614 = vmatpush2.msra.mxu0 0.0
      %615 = vmatprep.subr.mxu0 0.0
      %616 = vmatpush2.msra.mxu0 0.0
      %617 = vmatprep.subr.mxu0 0.0
      %618 = vmatpush2.msra.mxu0 0.0
      %619 = vmatprep.subr.mxu0 0.0
      %620 = vmatpush2.msra.mxu0 0.0
      %621 = vmatprep.subr.mxu0 0.0
      %622 = vmatpush2.msra.mxu0 0.0
      %623 = vmatprep.subr.mxu0 0.0
      %624 = vmatpush2.msra.mxu0 0.0
      %625 = vmatprep.subr.mxu0 0.0
      %626 = vmatpush2.msra.mxu0 0.0
      %627 = vmatprep.subr.mxu0 0.0
      %628 = vmatpush2.msra.mxu0 0.0
      %629 = vmatprep.mubr.f32.mxu0 0.0
      %630 = vmatmul.mubr.f32.gmra.mxu0 %v548
      %v631 = vpop.f32.mrf.mxu0
      %v632 = vadd.f32 0.0, %v631
      %v633 = vpop.f32.mrf.mxu0
      %v634 = vadd.f32 0.0, %v633
      %635 = vmatprep.mubr.f32.mxu0 0.0
      %636 = vmatmul.mubr.f32.gmra.mxu0 %v551
      %v637 = vpop.f32.mrf.mxu0
      %v638 = vadd.f32 0.0, %v637
      %v639 = vpop.f32.mrf.mxu0
      %v640 = vadd.f32 0.0, %v639
      %641 = vmatprep.mubr.f32.mxu0 0.0
      %642 = vmatmul.mubr.f32.gmra.mxu0 %v554
      %v643 = vpop.f32.mrf.mxu0
      %v644 = vadd.f32 0.0, %v643
      %v645 = vpop.f32.mrf.mxu0
      %v646 = vadd.f32 0.0, %v645
      %647 = vmatprep.mubr.f32.mxu0 0.0
      %648 = vmatmul.mubr.f32.gmra.mxu0 %v557
      %v649 = vpop.f32.mrf.mxu0
      %v650 = vadd.f32 0.0, %v649
      %v651 = vpop.f32.mrf.mxu0
      %v652 = vadd.f32 0.0, %v651
      %653 = vdwg.mxu0
      %v654 = vadd.f32 %v500, %v632
      %v655 = vadd.f32 %v502, %v634
      %v656 = vadd.f32 %v506, %v638
      %v657 = vadd.f32 %v508, %v640
      %v658 = vadd.f32 %v512, %v644
      %v659 = vadd.f32 %v514, %v646
      %v660 = vadd.f32 %v518, %v650
      %v661 = vadd.f32 %v520, %v652
      %s662 = scalar_lea.vmem %s2, 64
      %v663 = vld [vmem:[%s662] sm:$0xff]
      %v664 = vld [vmem:[%s662 + $0x8] sm:$0xff]
      %v665 = vld [vmem:[%s662 + $0x10] sm:$0xff]
      %v666 = vld [vmem:[%s662 + $0x18] sm:$0xff]
      %v667 = vlaneseq
      %v668 = vshrl.u32 %v667, 7
      %v669 = vsub.s32 2, %v668
      %v670 = vrot.slane %v272, %v669
      %v671 = vlaneseq
      %v672 = vshrl.u32 %v671, 7
      %v673 = vsub.s32 6, %v672
      %v674 = vrot.slane %v272, %v673
      %v677 = vlaneseq
      %v678 = vshrl.u32 %v677, 7
      %v679 = vsub.s32 2, %v678
      %v680 = vrot.slane %v670, %v679
      %v681 = vlaneseq
      %v682 = vshrl.u32 %v681, 7
      %v683 = vsub.s32 2, %v682
      %v684 = vrot.slane %v674, %v683
      %v685 = vmul.f32 %v680, %v271
      %v686 = vmul.f32 %v684, %v301
      %v688 = vsel %vm305, %v663, 0
      %v691 = vsel %vm305, %v664, 0
      %v694 = vsel %vm305, %v665, 0
      %v697 = vsel %vm305, %v666, 0
      %v700 = vsel %vm318, %v685, 0
      %v703 = vsel %vm318, %v686, 0
      %705 = vmatprep.subr.mxu0 0.0
      %706 = vmatpush1.msra.mxu0 0.0
      %707 = vmatprep.subr.mxu0 0.0
      %708 = vmatpush1.msra.mxu0 0.0
      %709 = vmatprep.subr.mxu0 0.0
      %710 = vmatpush1.msra.mxu0 0.0
      %711 = vmatprep.subr.mxu0 0.0
      %712 = vmatpush1.msra.mxu0 0.0
      %713 = vmatprep.subr.mxu0 0.0
      %714 = vmatpush1.msra.mxu0 0.0
      %715 = vmatprep.subr.mxu0 0.0
      %716 = vmatpush1.msra.mxu0 0.0
      %717 = vmatprep.subr.mxu0 0.0
      %718 = vmatpush1.msra.mxu0 0.0
      %719 = vmatprep.subr.mxu0 0.0
      %720 = vmatpush1.msra.mxu0 0.0
      %721 = vmatprep.subr.mxu0 0.0
      %722 = vmatpush1.msra.mxu0 0.0
      %723 = vmatprep.subr.mxu0 0.0
      %724 = vmatpush1.msra.mxu0 0.0
      %725 = vmatprep.subr.mxu0 0.0
      %726 = vmatpush1.msra.mxu0 0.0
      %727 = vmatprep.subr.mxu0 0.0
      %728 = vmatpush1.msra.mxu0 0.0
      %729 = vmatprep.subr.mxu0 0.0
      %730 = vmatpush1.msra.mxu0 0.0
      %731 = vmatprep.subr.mxu0 0.0
      %732 = vmatpush1.msra.mxu0 0.0
      %733 = vmatprep.subr.mxu0 0.0
      %734 = vmatpush1.msra.mxu0 0.0
      %735 = vmatprep.subr.mxu0 %v703
      %736 = vmatpush1.msra.mxu0 %v700
      %737 = vmatprep.subr.mxu0 0.0
      %738 = vmatpush2.msra.mxu0 0.0
      %739 = vmatprep.subr.mxu0 0.0
      %740 = vmatpush2.msra.mxu0 0.0
      %741 = vmatprep.subr.mxu0 0.0
      %742 = vmatpush2.msra.mxu0 0.0
      %743 = vmatprep.subr.mxu0 0.0
      %744 = vmatpush2.msra.mxu0 0.0
      %745 = vmatprep.subr.mxu0 0.0
      %746 = vmatpush2.msra.mxu0 0.0
      %747 = vmatprep.subr.mxu0 0.0
      %748 = vmatpush2.msra.mxu0 0.0
      %749 = vmatprep.subr.mxu0 0.0
      %750 = vmatpush2.msra.mxu0 0.0
      %751 = vmatprep.subr.mxu0 0.0
      %752 = vmatpush2.msra.mxu0 0.0
      %753 = vmatprep.subr.mxu0 0.0
      %754 = vmatpush2.msra.mxu0 0.0
      %755 = vmatprep.subr.mxu0 0.0
      %756 = vmatpush2.msra.mxu0 0.0
      %757 = vmatprep.subr.mxu0 0.0
      %758 = vmatpush2.msra.mxu0 0.0
      %759 = vmatprep.subr.mxu0 0.0
      %760 = vmatpush2.msra.mxu0 0.0
      %761 = vmatprep.subr.mxu0 0.0
      %762 = vmatpush2.msra.mxu0 0.0
      %763 = vmatprep.subr.mxu0 0.0
      %764 = vmatpush2.msra.mxu0 0.0
      %765 = vmatprep.subr.mxu0 0.0
      %766 = vmatpush2.msra.mxu0 0.0
      %767 = vmatprep.subr.mxu0 0.0
      %768 = vmatpush2.msra.mxu0 0.0
      %769 = vmatprep.mubr.f32.mxu0 0.0
      %770 = vmatmul.mubr.f32.gmra.mxu0 %v688
      %v771 = vpop.f32.mrf.mxu0
      %v772 = vadd.f32 0.0, %v771
      %v773 = vpop.f32.mrf.mxu0
      %v774 = vadd.f32 0.0, %v773
      %775 = vmatprep.mubr.f32.mxu0 0.0
      %776 = vmatmul.mubr.f32.gmra.mxu0 %v691
      %v777 = vpop.f32.mrf.mxu0
      %v778 = vadd.f32 0.0, %v777
      %v779 = vpop.f32.mrf.mxu0
      %v780 = vadd.f32 0.0, %v779
      %781 = vmatprep.mubr.f32.mxu0 0.0
      %782 = vmatmul.mubr.f32.gmra.mxu0 %v694
      %v783 = vpop.f32.mrf.mxu0
      %v784 = vadd.f32 0.0, %v783
      %v785 = vpop.f32.mrf.mxu0
      %v786 = vadd.f32 0.0, %v785
      %787 = vmatprep.mubr.f32.mxu0 0.0
      %788 = vmatmul.mubr.f32.gmra.mxu0 %v697
      %v789 = vpop.f32.mrf.mxu0
      %v790 = vadd.f32 0.0, %v789
      %v791 = vpop.f32.mrf.mxu0
      %v792 = vadd.f32 0.0, %v791
      %793 = vdwg.mxu0
      %v794 = vadd.f32 %v654, %v772
      %v795 = vadd.f32 %v655, %v774
      %v796 = vadd.f32 %v656, %v778
      %v797 = vadd.f32 %v657, %v780
      %v798 = vadd.f32 %v658, %v784
      %v799 = vadd.f32 %v659, %v786
      %v800 = vadd.f32 %v660, %v790
      %v801 = vadd.f32 %v661, %v792
      %v802 = vadd.f32 %v794, %v795
      %803 = vadd.xlane.f32.xlu0 %v802
      %v804 = vpop.xlane.xlu0 %803
      %v805 = vadd.f32 %v796, %v797
      %806 = vadd.xlane.f32.xlu0 %v805
      %v807 = vpop.xlane.xlu0 %806
      %v808 = vadd.f32 %v798, %v799
      %809 = vadd.xlane.f32.xlu0 %v808
      %v810 = vpop.xlane.xlu0 %809
      %v811 = vadd.f32 %v800, %v801
      %812 = vadd.xlane.f32.xlu0 %v811
      %v813 = vpop.xlane.xlu0 %812
      %v814 = vmul.f32 %v794, %v794
      %v815 = vmul.f32 %v795, %v795
      %v816 = vmul.f32 %v796, %v796
      %v817 = vmul.f32 %v797, %v797
      %v818 = vmul.f32 %v798, %v798
      %v819 = vmul.f32 %v799, %v799
      %v820 = vmul.f32 %v800, %v800
      %v821 = vmul.f32 %v801, %v801
      %v822 = vadd.f32 %v814, %v815
      %823 = vadd.xlane.f32.xlu0 %v822
      %v824 = vpop.xlane.xlu0 %823
      %v825 = vadd.f32 %v816, %v817
      %826 = vadd.xlane.f32.xlu0 %v825
      %v827 = vpop.xlane.xlu0 %826
      %v828 = vadd.f32 %v818, %v819
      %829 = vadd.xlane.f32.xlu0 %v828
      %v830 = vpop.xlane.xlu0 %829
      %v831 = vadd.f32 %v820, %v821
      %832 = vadd.xlane.f32.xlu0 %v831
      %v833 = vpop.xlane.xlu0 %832
      %vm834 = vcmask 7168
      %v835 = vsel %vm834, %v804, %v824
      %v836 = vsel %vm834, %v807, %v827
      %v837 = vsel %vm834, %v810, %v830
      %v838 = vsel %vm834, %v813, %v833
      %v839 = vld [vmem:[%s261] sm:$0xff]
      %v840 = vld [vmem:[%s261 + $0x8] sm:$0xff]
      %v841 = vld [vmem:[%s261 + $0x10] sm:$0xff]
      %v842 = vld [vmem:[%s261 + $0x18] sm:$0xff]
      %v843 = vadd.f32 %v839, %v835
      %v844 = vadd.f32 %v840, %v836
      %v845 = vadd.f32 %v841, %v837
      %v846 = vadd.f32 %v842, %v838
      %vm847 = vcmask 15360
      %848 = vst.msk [vmem:[%s261] sm:$0xff] %vm847, %v843
      %849 = vst.msk [vmem:[%s261 + $0x8] sm:$0xff] %vm847, %v844
      %850 = vst.msk [vmem:[%s261 + $0x10] sm:$0xff] %vm847, %v845
      %851 = vst.msk [vmem:[%s261 + $0x18] sm:$0xff] %vm847, %v846
      %p852 = scmp.lt.s32.totalorder %s19, 1
      %s853 = scalar_select %p852, %s19, 1
      %s854 = smul.addr %s853, 4
      %s855 = smul.addr %s854, 8
      %s856 = scalar_lea.vmem %s4, %s855
      // Predicated region
      $region41: #{tpu_custom_call.1} parent=35 // pred_check
        %p857 = pneg %p143
      $region42: #{tpu_custom_call.1} parent=35 // pred_check_branch
        %859 = sbr.rel (%p857) target = $region44
      $region43: #{tpu_custom_call.1} parent=35 // pred_region
        _
      $region44: #{tpu_custom_call.1} parent=35 // pred_fallthru
        _
    $region36: #{tpu_custom_call.1} parent=5 // pred_fallthru
      _
    %p860 = scmp.le.s32.totalorder 2, %s10
    // Predicated region
    $region45: #{tpu_custom_call.1} parent=5 // pred_check
      %p861 = pneg %p860
    $region46: #{tpu_custom_call.1} parent=5 // pred_check_branch
      %863 = sbr.rel (%p861) target = $region48
    $region47: #{tpu_custom_call.1} parent=5 // pred_region
      %s864 = ssub.s32 %s10, 2
      // Predicated region
      $region49: #{tpu_custom_call.1} parent=47 // pred_check
        %p865 = pneg %p149
      $region50: #{tpu_custom_call.1} parent=47 // pred_check_branch
        %867 = sbr.rel (%p865) target = $region52
      $region51: #{tpu_custom_call.1} parent=47 // pred_region
        %p868 = scmp.lt.s32.totalorder %s21, 1
        %s869 = scalar_select %p868, %s21, 1
        %s870 = smul.addr %s869, 4
        %s871 = smul.addr %s870, 8
        %s872 = scalar_lea.vmem %s4, %s871
      $region52: #{tpu_custom_call.1} parent=47 // pred_fallthru
        _
    $region48: #{tpu_custom_call.1} parent=5 // pred_fallthru
      _
  $region6: #{tpu_custom_call.1} parent=0 // loop_footer
    %s14 = sadd.s32 1, %s10
  $region7: #{tpu_custom_call.1} parent=0 // loop_footer_branch
    %9 = sbr.rel target = $region3
  $region8: #{tpu_custom_call.1} parent=0 // loop_exit
    _

</llo_original>
